<compile_context>
chip_gen: v6e
topology: v6e:2x2x1
jax: 0.10.0
libtpu: 0.0.40
codegen_flags: <defaults>
</compile_context>

<pallas_src>
import jax
import jax.numpy as jnp
import numpy as np
from jax import lax
from jax.experimental import pallas as pl
from jax.experimental.pallas import tpu as pltpu

BATCH = 2
SEQ = 16
C_IN = 8
D_MODEL = 128


def token_embedding_kernel(x_ref, w_ref, y_ref):
    x = x_ref[...]                                   # (B, L, C)
    B, L, C = x.shape
    D = y_ref.shape[-1]

    # Circular neighbours along the sequence axis (per batch element).
    x_prev = jnp.concatenate([x[:, L - 1:, :], x[:, :L - 1, :]], axis=1)  # x[(t-1) % L]
    x_next = jnp.concatenate([x[:, 1:, :], x[:, :1, :]], axis=1)          # x[(t+1) % L]

    # (B, L, 3C): [prev | curr | next] taps along the lane axis, then fold the
    # batch into the matmul rows -> a single MXU contraction for the whole conv.
    taps = jnp.concatenate([x_prev, x, x_next], axis=-1).reshape(B * L, 3 * C)
    y = jnp.dot(taps, w_ref[...], preferred_element_type=jnp.float32)     # (B*L, D)
    y_ref[...] = y.reshape(B, L, D).astype(y_ref.dtype)


def token_embedding(x, w_packed):
    B, L, C = x.shape
    D = w_packed.shape[1]
    return pl.pallas_call(
        token_embedding_kernel,
        grid=(1,),
        in_specs=[
            pl.BlockSpec((B, L, C), lambda i: (0, 0, 0)),
            pl.BlockSpec((3 * C, D), lambda i: (0, 0)),
        ],
        out_specs=pl.BlockSpec((B, L, D), lambda i: (0, 0, 0)),
        out_shape=jax.ShapeDtypeStruct((B, L, D), jnp.float32),
        compiler_params=pltpu.CompilerParams(dimension_semantics=("arbitrary",)),
    )(x, w_packed)


def pack_conv_weight(w_oik):
    """(d_model, c_in, 3) torch-layout Conv1d weight -> (3*c_in, d_model) slab.

    Row k*C + c holds conv_weight[:, c, k], matching taps column k*C + c
    ([prev | curr | next] ordering)."""
    d_model, c_in, _ = w_oik.shape
    return jnp.transpose(w_oik, (2, 1, 0)).reshape(3 * c_in, d_model)


def token_embedding_ref(x, w_oik):
    """Plain-JAX reference mirroring the PyTorch forward (circular Conv1d)."""
    xp = jnp.transpose(x, (0, 2, 1))                               # (B, C, L)
    xp = jnp.concatenate([xp[:, :, -1:], xp, xp[:, :, :1]], axis=-1)  # circular pad 1
    y = lax.conv_general_dilated(
        xp, w_oik, window_strides=(1,), padding="VALID",
        dimension_numbers=("NCH", "OIH", "NCH"),
        precision=lax.Precision.HIGHEST)
    return jnp.transpose(y, (0, 2, 1))                             # (B, L, D)


if __name__ == "__main__":
    key = jax.random.PRNGKey(0)
    kx, kw = jax.random.split(key)
    x = jax.random.normal(kx, (BATCH, SEQ, C_IN), dtype=jnp.float32)

    # Kaiming-normal-style init (fan_in = c_in * kernel_size, leaky_relu gain);
    # exact init values only matter for the reference comparison, not the kernel.
    fan_in = C_IN * 3
    gain = float(np.sqrt(2.0 / (1.0 + 0.01 ** 2)))
    w_torch = (gain / np.sqrt(fan_in)) * jax.random.normal(
        kw, (D_MODEL, C_IN, 3), dtype=jnp.float32)

    w_packed = pack_conv_weight(w_torch)

    y = jax.block_until_ready(token_embedding(x, w_packed))

    y_ref = token_embedding_ref(x, w_torch)
    np.testing.assert_allclose(np.asarray(y), np.asarray(y_ref), rtol=2e-3, atol=2e-3)

    print("KERNEL_OK")
</pallas_src>

<mosaic_0001>
module attributes {stable_mosaic.version = 11 : i64} {
  func.func @token_embedding_kernel(%arg0: i32, %arg1: memref<2x16x8xf32, #tpu.memory_space<vmem>>, %arg2: memref<24x128xf32, #tpu.memory_space<vmem>>, %arg3: memref<2x16x128xf32, #tpu.memory_space<vmem>>) attributes {dimension_semantics = [#tpu.dimension_semantics<arbitrary>], iteration_bounds = array<i64: 1>, scalar_prefetch = 0 : i64, scratch_operands = 0 : i64, tpu.core_type = #tpu.core_type<tc>, window_params = [{pipeline_mode = #tpu.pipeline_mode<synchronous>, transform_indices = @transform_0, window_bounds = array<i64: 2, 16, 8>}, {pipeline_mode = #tpu.pipeline_mode<synchronous>, transform_indices = @transform_1, window_bounds = array<i64: 24, 128>}, {pipeline_mode = #tpu.pipeline_mode<synchronous>, transform_indices = @transform_2, window_bounds = array<i64: 2, 16, 128>}]} {
    %c0 = arith.constant 0 : index
    %c0_0 = arith.constant 0 : index
    %c0_1 = arith.constant 0 : index
    %0 = vector.load %arg1[%c0, %c0_0, %c0_1] : memref<2x16x8xf32, #tpu.memory_space<vmem>>, vector<2x16x8xf32>
    %1 = vector.extract_strided_slice %0 {offsets = [0, 15, 0], sizes = [2, 1, 8], strides = [1, 1, 1]} : vector<2x16x8xf32> to vector<2x1x8xf32>
    %2 = vector.extract_strided_slice %0 {offsets = [0, 0, 0], sizes = [2, 15, 8], strides = [1, 1, 1]} : vector<2x16x8xf32> to vector<2x15x8xf32>
    %3 = tpu.concatenate %1, %2 in 1 : vector<2x1x8xf32>, vector<2x15x8xf32> -> vector<2x16x8xf32>
    %4 = vector.extract_strided_slice %0 {offsets = [0, 1, 0], sizes = [2, 15, 8], strides = [1, 1, 1]} : vector<2x16x8xf32> to vector<2x15x8xf32>
    %5 = vector.extract_strided_slice %0 {offsets = [0, 0, 0], sizes = [2, 1, 8], strides = [1, 1, 1]} : vector<2x16x8xf32> to vector<2x1x8xf32>
    %6 = tpu.concatenate %4, %5 in 1 : vector<2x15x8xf32>, vector<2x1x8xf32> -> vector<2x16x8xf32>
    %7 = tpu.concatenate %3, %0, %6 in 2 : vector<2x16x8xf32>, vector<2x16x8xf32>, vector<2x16x8xf32> -> vector<2x16x24xf32>
    %8 = vector.shape_cast %7 : vector<2x16x24xf32> to vector<32x24xf32>
    %c0_2 = arith.constant 0 : index
    %c0_3 = arith.constant 0 : index
    %9 = vector.load %arg2[%c0_2, %c0_3] : memref<24x128xf32, #tpu.memory_space<vmem>>, vector<24x128xf32>
    %cst = arith.constant dense<0.000000e+00> : vector<32x128xf32>
    %10 = tpu.matmul %8, %9, %cst {dimension_numbers = #tpu.dot_dimension_numbers<[1], [0], [0], [1], [0, 0, 1, 1], [], []>} : vector<32x24xf32>, vector<24x128xf32>, vector<32x128xf32> -> vector<32x128xf32>
    %11 = vector.shape_cast %10 : vector<32x128xf32> to vector<2x16x128xf32>
    %c0_4 = arith.constant 0 : index
    %c0_5 = arith.constant 0 : index
    %c0_6 = arith.constant 0 : index
    %12 = vector.load %arg3[%c0_4, %c0_5, %c0_6] : memref<2x16x128xf32, #tpu.memory_space<vmem>>, vector<2x16x128xf32>
    tpu.vector_store %arg3[%c0_4, %c0_5, %c0_6], %11 {strides = array<i32>} : memref<2x16x128xf32, #tpu.memory_space<vmem>>, vector<2x16x128xf32>,
    return
  }
  func.func @transform_0(%arg0: i32) -> (i32, i32, i32) {
    %c0_i32 = arith.constant 0 : i32
    %c0_i32_0 = arith.constant 0 : i32
    %c0_i32_1 = arith.constant 0 : i32
    %c0_i32_2 = arith.constant 0 : i32
    return %c0_i32, %c0_i32_0, %c0_i32_1 : i32, i32, i32
  }
  func.func @transform_1(%arg0: i32) -> (i32, i32) {
    %c0_i32 = arith.constant 0 : i32
    %c0_i32_0 = arith.constant 0 : i32
    %c0_i32_1 = arith.constant 0 : i32
    return %c0_i32, %c0_i32_0 : i32, i32
  }
  func.func @transform_2(%arg0: i32) -> (i32, i32, i32) {
    %c0_i32 = arith.constant 0 : i32
    %c0_i32_0 = arith.constant 0 : i32
    %c0_i32_1 = arith.constant 0 : i32
    %c0_i32_2 = arith.constant 0 : i32
    return %c0_i32, %c0_i32_0, %c0_i32_1 : i32, i32, i32
  }
}

</mosaic_0001>

<llo_original>
// kernel: tpu_custom_call.1
$region0: #{tpu_custom_call.1}
  #allocation0 [shape = 'u32[]', space=smem, size = 0x4, offset = 0x4, fixed_abs, tag = 'smem constant byte address 0x4 - core index']
  #allocation1 [shape = 'u32[144,128]{1,0:T(1,128)}', space=vmem, size = 0x12000, scoped, tag = 'internal scratch']
  %s0 = inlined_call_operand.vmem [shape: f32[2,16,8], index: 0, kind: input, shape index: {}]
  %s1 = inlined_call_operand.vmem [shape: f32[24,128], index: 1, kind: input, shape index: {}]
  %s2 = inlined_call_operand.hbm [shape: f32[2,16,128], index: 2, kind: output, shape index: {}]
  %s3 = sld [smem:[#allocation0]]
  $region18: #{tpu_custom_call.1} parent=0
    _
  %s5 = ssub.s32 1, %s3
  %s6 = scalar_select 0, %s5, %s3
  $region1: #{tpu_custom_call.1} parent=0
    #allocation2 [shape = 'u8[16384]{0}', space=vmem, size = 0x4000, scoped, tag = 'output window, operand 0, single buffered']
    #allocation3 [shape = 's32[1]{0}', space=sflag, size = 0x4, scoped, tag = 'scoped memory for tpu_custom_call.1']
    %7 = vsyncpa [#allocation3], 0
    // Predicated region
    $region2: #{tpu_custom_call.1} parent=1 // pred_check
      _
    $region3: #{tpu_custom_call.1} parent=1 // pred_check_branch
      %9 = sbr.rel (0) target = $region5
    $region4: #{tpu_custom_call.1} parent=1 // pred_region
      _
    $region5: #{tpu_custom_call.1} parent=1 // pred_fallthru
      _
    // Predicated region
    $region6: #{tpu_custom_call.1} parent=1 // pred_check
      _
    $region7: #{tpu_custom_call.1} parent=1 // pred_check_branch
      %11 = sbr.rel (0) target = $region9
    $region8: #{tpu_custom_call.1} parent=1 // pred_region
      _
    $region9: #{tpu_custom_call.1} parent=1 // pred_fallthru
      _
    %v12 = vld [vmem:[%s0] sm:$0xff]
    %v13 = vld [vmem:[%s0 + $0x8] sm:$0xff]
    %v14 = vld [vmem:[%s0 + $0x10] sm:$0xff]
    %v15 = vld [vmem:[%s0 + $0x18] sm:$0xff]
    %v18 = vrot.slane %v13, 7
    %v19 = vrot.slane %v15, 7
    %vm24 = vcmask 1040384
    %v25 = vrot.slane %v12, 7
    %v26 = vsel %vm24, %v25, %v18
    %v27 = vrot.slane %v14, 7
    %v28 = vsel %vm24, %v27, %v19
    %v33 = vsel %vm24, %v18, %v25
    %v34 = vsel %vm24, %v19, %v27
    %vm35 = vcmask 1046528
    %v36 = vrot.slane %v12, 1
    %v37 = vrot.slane %v13, 1
    %v38 = vsel %vm35, %v36, %v37
    %v39 = vrot.slane %v14, 1
    %v40 = vrot.slane %v15, 1
    %v41 = vsel %vm35, %v39, %v40
    %v46 = vsel %vm35, %v37, %v36
    %v47 = vsel %vm35, %v40, %v39
    %48 = vrot.lane.b32.xlu0 %v12, 8
    %v49 = vpop.permute.xlu0 %48
    %50 = vrot.lane.b32.xlu0 %v13, 8
    %v51 = vpop.permute.xlu0 %50
    %52 = vrot.lane.b32.xlu0 %v14, 8
    %v53 = vpop.permute.xlu0 %52
    %54 = vrot.lane.b32.xlu0 %v15, 8
    %v55 = vpop.permute.xlu0 %54
    %62 = vrot.lane.b32.xlu0 %v38, 16
    %v63 = vpop.permute.xlu0 %62
    %64 = vrot.lane.b32.xlu0 %v46, 16
    %v65 = vpop.permute.xlu0 %64
    %66 = vrot.lane.b32.xlu0 %v41, 16
    %v67 = vpop.permute.xlu0 %66
    %68 = vrot.lane.b32.xlu0 %v47, 16
    %v69 = vpop.permute.xlu0 %68
    %vm74 = vcmask 64512
    %v75 = vsel %vm74, %v33, %v49
    %v76 = vsel %vm74, %v26, %v51
    %v77 = vsel %vm74, %v34, %v53
    %v78 = vsel %vm74, %v28, %v55
    %vm79 = vcmask 130048
    %v80 = vsel %vm79, %v75, %v63
    %v81 = vsel %vm79, %v76, %v65
    %v82 = vsel %vm79, %v77, %v67
    %v83 = vsel %vm79, %v78, %v69
    %v84 = vld [vmem:[%s1] sm:$0xff]
    %v85 = vld [vmem:[%s1 + $0x8] sm:$0xff]
    %v86 = vld [vmem:[%s1 + $0x10] sm:$0xff]
    %vm87 = vcmask 195584
    %v89 = vsel %vm87, %v80, 0
    %v92 = vsel %vm87, %v81, 0
    %v95 = vsel %vm87, %v82, 0
    %v98 = vsel %vm87, %v83, 0
    %100 = vmatprep.subr.mxu0 0.0
    %101 = vmatpush1.msra.mxu0 0.0
    %102 = vmatprep.subr.mxu0 0.0
    %103 = vmatpush1.msra.mxu0 0.0
    %104 = vmatprep.subr.mxu0 0.0
    %105 = vmatpush1.msra.mxu0 0.0
    %106 = vmatprep.subr.mxu0 0.0
    %107 = vmatpush1.msra.mxu0 0.0
    %108 = vmatprep.subr.mxu0 0.0
    %109 = vmatpush1.msra.mxu0 0.0
    %110 = vmatprep.subr.mxu0 0.0
    %111 = vmatpush1.msra.mxu0 0.0
    %112 = vmatprep.subr.mxu0 0.0
    %113 = vmatpush1.msra.mxu0 0.0
    %114 = vmatprep.subr.mxu0 0.0
    %115 = vmatpush1.msra.mxu0 0.0
    %116 = vmatprep.subr.mxu0 0.0
    %117 = vmatpush1.msra.mxu0 0.0
    %118 = vmatprep.subr.mxu0 0.0
    %119 = vmatpush1.msra.mxu0 0.0
    %120 = vmatprep.subr.mxu0 0.0
    %121 = vmatpush1.msra.mxu0 0.0
    %122 = vmatprep.subr.mxu0 0.0
    %123 = vmatpush1.msra.mxu0 0.0
    %124 = vmatprep.subr.mxu0 0.0
    %125 = vmatpush1.msra.mxu0 0.0
    %126 = vmatprep.subr.mxu0 0.0
    %127 = vmatpush1.msra.mxu0 %v86
    %128 = vmatprep.subr.mxu0 0.0
    %129 = vmatpush1.msra.mxu0 %v85
    %130 = vmatprep.subr.mxu0 0.0
    %131 = vmatpush1.msra.mxu0 %v84
    %132 = vmatprep.subr.mxu0 0.0
    %133 = vmatpush2.msra.mxu0 0.0
    %134 = vmatprep.subr.mxu0 0.0
    %135 = vmatpush2.msra.mxu0 0.0
    %136 = vmatprep.subr.mxu0 0.0
    %137 = vmatpush2.msra.mxu0 0.0
    %138 = vmatprep.subr.mxu0 0.0
    %139 = vmatpush2.msra.mxu0 0.0
    %140 = vmatprep.subr.mxu0 0.0
    %141 = vmatpush2.msra.mxu0 0.0
    %142 = vmatprep.subr.mxu0 0.0
    %143 = vmatpush2.msra.mxu0 0.0
    %144 = vmatprep.subr.mxu0 0.0
    %145 = vmatpush2.msra.mxu0 0.0
    %146 = vmatprep.subr.mxu0 0.0
    %147 = vmatpush2.msra.mxu0 0.0
    %148 = vmatprep.subr.mxu0 0.0
    %149 = vmatpush2.msra.mxu0 0.0
    %150 = vmatprep.subr.mxu0 0.0
    %151 = vmatpush2.msra.mxu0 0.0
    %152 = vmatprep.subr.mxu0 0.0
    %153 = vmatpush2.msra.mxu0 0.0
    %154 = vmatprep.subr.mxu0 0.0
    %155 = vmatpush2.msra.mxu0 0.0
    %156 = vmatprep.subr.mxu0 0.0
    %157 = vmatpush2.msra.mxu0 0.0
    %158 = vmatprep.subr.mxu0 0.0
    %159 = vmatpush2.msra.mxu0 0.0
    %160 = vmatprep.subr.mxu0 0.0
    %161 = vmatpush2.msra.mxu0 0.0
    %162 = vmatprep.subr.mxu0 0.0
    %163 = vmatpush2.msra.mxu0 0.0
    %164 = vmatprep.mubr.f32.mxu0 0.0
    %165 = vmatmul.mubr.f32.gmra.mxu0 %v89
    %v166 = vpop.f32.mrf.mxu0
    %v167 = vadd.f32 0.0, %v166
    %v168 = vpop.f32.mrf.mxu0
    %169 = vmatprep.mubr.f32.mxu0 0.0
    %170 = vmatmul.mubr.f32.gmra.mxu0 %v92
    %v171 = vpop.f32.mrf.mxu0
    %v172 = vadd.f32 0.0, %v171
    %v173 = vpop.f32.mrf.mxu0
    %174 = vmatprep.mubr.f32.mxu0 0.0
    %175 = vmatmul.mubr.f32.gmra.mxu0 %v95
    %v176 = vpop.f32.mrf.mxu0
    %v177 = vadd.f32 0.0, %v176
    %v178 = vpop.f32.mrf.mxu0
    %179 = vmatprep.mubr.f32.mxu0 0.0
    %180 = vmatmul.mubr.f32.gmra.mxu0 %v98
    %v181 = vpop.f32.mrf.mxu0
    %v182 = vadd.f32 0.0, %v181
    %v183 = vpop.f32.mrf.mxu0
    %184 = vdwg.mxu0
    %185 = vst [vmem:[#allocation2] sm:$0xff] %v167
    %186 = vst [vmem:[#allocation2 + $0x8] sm:$0xff] %v172
    %187 = vst [vmem:[#allocation2 + $0x10] sm:$0xff] %v177
    %188 = vst [vmem:[#allocation2 + $0x18] sm:$0xff] %v182
    // Predicated region
    $region10: #{tpu_custom_call.1} parent=1 // pred_check
      _
    $region11: #{tpu_custom_call.1} parent=1 // pred_check_branch
      %190 = sbr.rel (0) target = $region13
    $region12: #{tpu_custom_call.1} parent=1 // pred_region
      %s192 = ssub.s32 512, 512
      %193 = vsyncadd [#allocation3], %s192
      %s194 = sshll.u32 [#allocation2], 4
      %s195 = int_to_ptr.vmem [resolvable:$true] %s194
      %200 = dma.vmem_to_hbm [thread:$0]  %s195, 512, %s2, [#allocation3], 128, 128, 8
    $region13: #{tpu_custom_call.1} parent=1 // pred_fallthru
      _
    // Predicated region
    $region14: #{tpu_custom_call.1} parent=1 // pred_check
      _
    $region15: #{tpu_custom_call.1} parent=1 // pred_check_branch
      %202 = sbr.rel (0) target = $region17
    $region16: #{tpu_custom_call.1} parent=1 // pred_region
      %203 = dma.done [#allocation3], 512
    $region17: #{tpu_custom_call.1} parent=1 // pred_fallthru
      _
    %204 = vsyncpa [#allocation3], 1

</llo_original>
